<compile_context>
chip_gen: v5e
topology: v5e:2x2
jax: 0.10.0
libtpu: 0.0.40
codegen_flags: <defaults>
</compile_context>

<pallas_src>
import functools

import jax
import jax.numpy as jnp
from jax import lax
from jax.experimental import pallas as pl
from jax.experimental.pallas import tpu as pltpu

_LANES = 128
_F32_BYTES = 4


def _round_up(x, m):
    return ((x + m - 1) // m) * m


def _lr_kernel(x1_ref, x2_ref, w1_ref, w2_ref, b_ref, out_ref):
    """One batch tile.

    x1: [tb, D1]        x2: [tb, D2]
    w1: [2*Dout, D1]    w2: [2*Dout, D2]   (weight stacked twice along rows)
    b : [2*Dout, 1]
    out: [2*Dout, tb]   rows [0, Dout)      -> linear^T
                        rows [Dout, 2*Dout) -> sigmoid(linear)^T
    """
    dn = (((1,), (1,)), ((), ()))  # contract the feature dims, no batch dims
    z = (
        lax.dot_general(w1_ref[...], x1_ref[...], dn,
                        preferred_element_type=jnp.float32)
        + lax.dot_general(w2_ref[...], x2_ref[...], dn,
                          preferred_element_type=jnp.float32)
        + b_ref[...]
    )  # [2*Dout, tb]; rows are duplicated Dout-wise by the stacked weight
    dout = out_ref.shape[0] // 2
    row = lax.broadcasted_iota(jnp.int32, z.shape, 0)
    # One full-vreg, unmasked store: top half linear, bottom half sigmoid.
    out_ref[...] = jnp.where(row < dout, z, jax.nn.sigmoid(z)).astype(out_ref.dtype)


def _vmem_capacity_bytes():
    try:
        info = pltpu.get_tpu_info()
        cap = int(getattr(info, "vmem_capacity_bytes", 0))
        if cap > 0:
            return cap
    except Exception:
        pass
    return 64 << 20  # conservative fallback = smallest generation (v7x: 64 MiB)


def _pick_tile(B, D1, D2, dout2):
    """Largest lane-aligned batch tile fitting the generation's VMEM budget,
    keeping >= 2 grid steps when possible (v7x megacore sharding)."""
    phys = _vmem_capacity_bytes()
    budget = (phys * 3) // 4  # headroom for compiler-internal scratch etc.
    # Double-buffered VMEM bytes per batch row for one grid step:
    #   input tiles pad their narrow feature dim to 128 lanes; output is lane-dense.
    per_row = 2 * ((_round_up(D1, _LANES) + _round_up(D2, _LANES) + dout2) * _F32_BYTES)
    tb_cap = max(_LANES, (budget // per_row) // _LANES * _LANES)
    tb = min(tb_cap, _round_up(pl.cdiv(B, 2), _LANES))
    if tb >= B:
        tb = B  # single block covering the full array (always a legal block shape)
    vmem_limit = int(min((phys * 7) // 8, tb * per_row + (16 << 20)))
    return tb, vmem_limit


@functools.partial(jax.jit, static_argnames=("tb", "vmem_limit"))
def _lr_forward(inputs, inputs_demoips, weight, bias, tb, vmem_limit):
    B, D1 = inputs.shape
    D2 = inputs_demoips.shape[1]
    Dout = weight.shape[0]
    dout2 = 2 * Dout

    # torch.cat fused away: split the weight statically; stack it twice so the
    # kernel emits one merged [2*Dout, tb] tile with a single unmasked store.
    w_stack = jnp.concatenate([weight, weight], axis=0)  # [2*Dout, D1+D2]
    w1 = w_stack[:, :D1]                                 # [2*Dout, D1]
    w2 = w_stack[:, D1:]                                 # [2*Dout, D2]
    b2 = jnp.concatenate([bias, bias], axis=0).reshape(dout2, 1)

    grid = (pl.cdiv(B, tb),)  # no input padding: ragged last block is masked
    merged = pl.pallas_call(
        _lr_kernel,
        out_shape=jax.ShapeDtypeStruct((dout2, B), jnp.float32),
        grid=grid,
        in_specs=[
            pl.BlockSpec((tb, D1), lambda i: (i, 0)),     # x1 tile
            pl.BlockSpec((tb, D2), lambda i: (i, 0)),     # x2 tile
            pl.BlockSpec((dout2, D1), lambda i: (0, 0)),  # stacked W, left half
            pl.BlockSpec((dout2, D2), lambda i: (0, 0)),  # stacked W, right half
            pl.BlockSpec((dout2, 1), lambda i: (0, 0)),   # stacked bias
        ],
        out_specs=pl.BlockSpec((dout2, tb), lambda i: (0, i)),
        compiler_params=pltpu.CompilerParams(
            dimension_semantics=("parallel",),
            vmem_limit_bytes=vmem_limit,
        ),
    )(inputs, inputs_demoips, w1, w2, b2)

    # Restore the PyTorch [B, Dout] layout: one tiny fused slice+transpose per
    # output (no un-padding slice needed).
    linear = merged[:Dout, :].T
    output = merged[Dout:, :].T
    return output, linear


def lr_model_forward(inputs, inputs_demoips, weight, bias):
    """Forward pass of LRmodel.  Returns (sigmoid(linear), linear), each [B, Dout]."""
    B, D1 = inputs.shape
    D2 = inputs_demoips.shape[1]
    tb, vmem_limit = _pick_tile(B, D1, D2, 2 * weight.shape[0])
    return _lr_forward(inputs, inputs_demoips, weight, bias, tb, vmem_limit)


if __name__ == "__main__":
    initrange = 0.1
    d_main, d_demo, output_dim = 24, 8, 4
    input_dim = d_main + d_demo  # 32

    key = jax.random.PRNGKey(0)
    k_w, k_b, k_x1, k_d1, k_x2, k_d2 = jax.random.split(key, 6)

    # Deterministic init mimicking param.data.uniform_(-initrange, initrange).
    weight = jax.random.uniform(
        k_w, (output_dim, input_dim), dtype=jnp.float32,
        minval=-initrange, maxval=initrange)
    bias = jax.random.uniform(
        k_b, (output_dim,), dtype=jnp.float32,
        minval=-initrange, maxval=initrange)

    def reference(a, b):
        x = jnp.concatenate([a, b], axis=1)
        lin = x @ weight.T + bias
        return jax.nn.sigmoid(lin), lin

    # Case 1: tiny batch -> single full-array block (tb == B path).
    inputs = jax.random.normal(k_x1, (8, d_main), dtype=jnp.float32)
    inputs_demoips = jax.random.normal(k_d1, (8, d_demo), dtype=jnp.float32)
    out, lin = lr_model_forward(inputs, inputs_demoips, weight, bias)
    jax.block_until_ready((out, lin))
    ref_out, ref_lin = reference(inputs, inputs_demoips)
    assert out.shape == (8, output_dim) and lin.shape == (8, output_dim)
    assert jnp.allclose(lin, ref_lin, atol=1e-5), "linear mismatch (small batch)"
    assert jnp.allclose(out, ref_out, atol=1e-5), "sigmoid mismatch (small batch)"

    # Case 2: non-tile-aligned batch -> multi-step grid with a ragged, masked tail.
    inputs = jax.random.normal(k_x2, (1030, d_main), dtype=jnp.float32)
    inputs_demoips = jax.random.normal(k_d2, (1030, d_demo), dtype=jnp.float32)
    out, lin = lr_model_forward(inputs, inputs_demoips, weight, bias)
    jax.block_until_ready((out, lin))
    ref_out, ref_lin = reference(inputs, inputs_demoips)
    assert out.shape == (1030, output_dim) and lin.shape == (1030, output_dim)
    assert jnp.allclose(lin, ref_lin, atol=1e-5), "linear mismatch (tiled batch)"
    assert jnp.allclose(out, ref_out, atol=1e-5), "sigmoid mismatch (tiled batch)"

    print("KERNEL_OK")
</pallas_src>

<mosaic_0001>
module attributes {stable_mosaic.version = 11 : i64} {
  func.func @_lr_kernel(%arg0: i32, %arg1: memref<8x24xf32, #tpu.memory_space<vmem>>, %arg2: memref<8x8xf32, #tpu.memory_space<vmem>>, %arg3: memref<8x24xf32, #tpu.memory_space<vmem>>, %arg4: memref<8x8xf32, #tpu.memory_space<vmem>>, %arg5: memref<8x1xf32, #tpu.memory_space<vmem>>, %arg6: memref<8x8xf32, #tpu.memory_space<vmem>>) attributes {dimension_semantics = [#tpu.dimension_semantics<parallel>], iteration_bounds = array<i64: 1>, scalar_prefetch = 0 : i64, scratch_operands = 0 : i64, tpu.core_type = #tpu.core_type<tc>, window_params = [{transform_indices = @transform_0, window_bounds = array<i64: 8, 24>}, {transform_indices = @transform_1, window_bounds = array<i64: 8, 8>}, {pipeline_mode = #tpu.pipeline_mode<synchronous>, transform_indices = @transform_2, window_bounds = array<i64: 8, 24>}, {pipeline_mode = #tpu.pipeline_mode<synchronous>, transform_indices = @transform_3, window_bounds = array<i64: 8, 8>}, {pipeline_mode = #tpu.pipeline_mode<synchronous>, transform_indices = @transform_4, window_bounds = array<i64: 8, 1>}, {transform_indices = @transform_5, window_bounds = array<i64: 8, 8>}]} {
    %c0 = arith.constant 0 : index
    %c0_0 = arith.constant 0 : index
    %0 = vector.load %arg3[%c0, %c0_0] : memref<8x24xf32, #tpu.memory_space<vmem>>, vector<8x24xf32>
    %c0_1 = arith.constant 0 : index
    %c0_2 = arith.constant 0 : index
    %1 = vector.load %arg1[%c0_1, %c0_2] : memref<8x24xf32, #tpu.memory_space<vmem>>, vector<8x24xf32>
    %cst = arith.constant dense<0.000000e+00> : vector<8x8xf32>
    %2 = tpu.matmul %0, %1, %cst {dimension_numbers = #tpu.dot_dimension_numbers<[1], [1], [0], [0], [0, 0, 1, 0], [], []>} : vector<8x24xf32>, vector<8x24xf32>, vector<8x8xf32> -> vector<8x8xf32>
    %c0_3 = arith.constant 0 : index
    %c0_4 = arith.constant 0 : index
    %3 = vector.load %arg4[%c0_3, %c0_4] : memref<8x8xf32, #tpu.memory_space<vmem>>, vector<8x8xf32>
    %c0_5 = arith.constant 0 : index
    %c0_6 = arith.constant 0 : index
    %4 = vector.load %arg2[%c0_5, %c0_6] : memref<8x8xf32, #tpu.memory_space<vmem>>, vector<8x8xf32>
    %cst_7 = arith.constant dense<0.000000e+00> : vector<8x8xf32>
    %5 = tpu.matmul %3, %4, %cst_7 {dimension_numbers = #tpu.dot_dimension_numbers<[1], [1], [0], [0], [0, 0, 1, 0], [], []>} : vector<8x8xf32>, vector<8x8xf32>, vector<8x8xf32> -> vector<8x8xf32>
    %6 = arith.addf %2, %5 : vector<8x8xf32>
    %c0_8 = arith.constant 0 : index
    %c0_9 = arith.constant 0 : index
    %7 = vector.load %arg5[%c0_8, %c0_9] : memref<8x1xf32, #tpu.memory_space<vmem>>, vector<8x1xf32>
    %8 = vector.broadcast %7 : vector<8x1xf32> to vector<8x8xf32>
    %9 = arith.addf %6, %8 : vector<8x8xf32>
    %10 = tpu.iota {dimensions = array<i32: 0>} : vector<8x8xi32>
    %c4_i32 = arith.constant 4 : i32
    %11 = vector.broadcast %c4_i32 : i32 to vector<8x8xi32>
    %12 = arith.cmpi slt, %10, %11 : vector<8x8xi32>
    %13 = arith.negf %9 : vector<8x8xf32>
    %14 = math.exp %13 : vector<8x8xf32>
    %cst_10 = arith.constant 1.000000e+00 : f32
    %15 = vector.broadcast %cst_10 : f32 to vector<8x8xf32>
    %16 = arith.addf %15, %14 : vector<8x8xf32>
    %17 = arith.divf %15, %16 : vector<8x8xf32>
    %18 = arith.select %12, %9, %17 : vector<8x8xi1>, vector<8x8xf32>
    %c0_11 = arith.constant 0 : index
    %c0_12 = arith.constant 0 : index
    %19 = vector.load %arg6[%c0_11, %c0_12] : memref<8x8xf32, #tpu.memory_space<vmem>>, vector<8x8xf32>
    tpu.vector_store %arg6[%c0_11, %c0_12], %18 {strides = array<i32>} : memref<8x8xf32, #tpu.memory_space<vmem>>, vector<8x8xf32>,
    return
  }
  func.func @transform_0(%arg0: i32) -> (i32, i32) {
    %c0_i32 = arith.constant 0 : i32
    %c0_i32_0 = arith.constant 0 : i32
    return %arg0, %c0_i32 : i32, i32
  }
  func.func @transform_1(%arg0: i32) -> (i32, i32) {
    %c0_i32 = arith.constant 0 : i32
    %c0_i32_0 = arith.constant 0 : i32
    return %arg0, %c0_i32 : i32, i32
  }
  func.func @transform_2(%arg0: i32) -> (i32, i32) {
    %c0_i32 = arith.constant 0 : i32
    %c0_i32_0 = arith.constant 0 : i32
    %c0_i32_1 = arith.constant 0 : i32
    return %c0_i32, %c0_i32_0 : i32, i32
  }
  func.func @transform_3(%arg0: i32) -> (i32, i32) {
    %c0_i32 = arith.constant 0 : i32
    %c0_i32_0 = arith.constant 0 : i32
    %c0_i32_1 = arith.constant 0 : i32
    return %c0_i32, %c0_i32_0 : i32, i32
  }
  func.func @transform_4(%arg0: i32) -> (i32, i32) {
    %c0_i32 = arith.constant 0 : i32
    %c0_i32_0 = arith.constant 0 : i32
    %c0_i32_1 = arith.constant 0 : i32
    return %c0_i32, %c0_i32_0 : i32, i32
  }
  func.func @transform_5(%arg0: i32) -> (i32, i32) {
    %c0_i32 = arith.constant 0 : i32
    %c0_i32_0 = arith.constant 0 : i32
    return %c0_i32, %arg0 : i32, i32
  }
}

</mosaic_0001>

<llo_original>
// kernel: _lr_forward.1
$region0: #{_lr_forward.1}
  #allocation0 [shape = 'u32[]', space=smem, size = 0x4, offset = 0x4, fixed_abs, tag = 'smem constant byte address 0x4 - core index']
  #allocation1 [shape = 'u32[72,128]{1,0:T(1,128)}', space=vmem, size = 0x9000, scoped, tag = 'internal scratch']
  %s0 = inlined_call_operand.vmem [shape: f32[8,24], index: 0, kind: input, shape index: {}]
  %s1 = inlined_call_operand.vmem [shape: f32[8,8], index: 1, kind: input, shape index: {}]
  %s2 = inlined_call_operand.vmem [shape: f32[8,24], index: 2, kind: input, shape index: {}]
  %s3 = inlined_call_operand.vmem [shape: f32[8,8], index: 3, kind: input, shape index: {}]
  %s4 = inlined_call_operand.vmem [shape: f32[8,1], index: 4, kind: input, shape index: {}]
  %s5 = inlined_call_operand.vmem [shape: f32[8,8], index: 5, kind: output, shape index: {}]
  %s6 = sld [smem:[#allocation0]]
  $region30: #{_lr_forward.1} parent=0
    _
  %s8 = ssub.s32 1, %s6
  %s9 = scalar_select 0, %s8, %s6
  // Predicated region
  $region2: #{_lr_forward.1} parent=0 // pred_check
    _
  $region3: #{_lr_forward.1} parent=0 // pred_check_branch
    %11 = sbr.rel (0) target = $region5
  $region4: #{_lr_forward.1} parent=0 // pred_region
    _
  $region5: #{_lr_forward.1} parent=0 // pred_fallthru
    _
  // Predicated region
  $region6: #{_lr_forward.1} parent=0 // pred_check
    _
  $region7: #{_lr_forward.1} parent=0 // pred_check_branch
    %13 = sbr.rel (0) target = $region9
  $region8: #{_lr_forward.1} parent=0 // pred_region
    _
  $region9: #{_lr_forward.1} parent=0 // pred_fallthru
    _
  // Predicated region
  $region10: #{_lr_forward.1} parent=0 // pred_check
    _
  $region11: #{_lr_forward.1} parent=0 // pred_check_branch
    %15 = sbr.rel (0) target = $region13
  $region12: #{_lr_forward.1} parent=0 // pred_region
    _
  $region13: #{_lr_forward.1} parent=0 // pred_fallthru
    _
  // Predicated region
  $region14: #{_lr_forward.1} parent=0 // pred_check
    _
  $region15: #{_lr_forward.1} parent=0 // pred_check_branch
    %17 = sbr.rel (0) target = $region17
  $region16: #{_lr_forward.1} parent=0 // pred_region
    _
  $region17: #{_lr_forward.1} parent=0 // pred_fallthru
    _
  // Predicated region
  $region18: #{_lr_forward.1} parent=0 // pred_check
    _
  $region19: #{_lr_forward.1} parent=0 // pred_check_branch
    %19 = sbr.rel (0) target = $region21
  $region20: #{_lr_forward.1} parent=0 // pred_region
    _
  $region21: #{_lr_forward.1} parent=0 // pred_fallthru
    _
  %v20 = vld [vmem:[%s2] sm:$0xff]
  %v21 = vld [vmem:[%s0] sm:$0xff]
  %v22 = vld [vmem:[%s3] sm:$0xff]
  %v23 = vld [vmem:[%s1] sm:$0xff]
  %vm24 = vcmask 64512
  %v26 = vsel %vm24, %v22, 0
  %v29 = vsel %vm24, %v23, 0
  %31 = vmatpush.xpose.msra.mxu0 0.0
  %32 = vmatpush.xpose.msra.mxu0 0.0
  %33 = vmatpush.xpose.msra.mxu0 0.0
  %34 = vmatpush.xpose.msra.mxu0 0.0
  %35 = vmatpush.xpose.msra.mxu0 0.0
  %36 = vmatpush.xpose.msra.mxu0 0.0
  %37 = vmatpush.xpose.msra.mxu0 0.0
  %38 = vmatpush.xpose.msra.mxu0 0.0
  %39 = vmatpush.xpose.msra.mxu0 0.0
  %40 = vmatpush.xpose.msra.mxu0 0.0
  %41 = vmatpush.xpose.msra.mxu0 0.0
  %42 = vmatpush.xpose.msra.mxu0 0.0
  %43 = vmatpush.xpose.msra.mxu0 0.0
  %44 = vmatpush.xpose.msra.mxu0 0.0
  %45 = vmatpush.xpose.msra.mxu0 0.0
  %46 = vmatpush.xpose.msra.mxu0 %v29
  %47 = vmatmul.f32.gmra.mxu0 %v26
  %v48 = vpop.f32.mrf.mxu0
  %v49 = vadd.f32 0.0, %v48
  %50 = vdwg.mxu0
  %vm51 = vcmask 195584
  %v53 = vsel %vm51, %v20, 0
  %v56 = vsel %vm51, %v21, 0
  %58 = vmatpush.xpose.msra.mxu0 0.0
  %59 = vmatpush.xpose.msra.mxu0 0.0
  %60 = vmatpush.xpose.msra.mxu0 0.0
  %61 = vmatpush.xpose.msra.mxu0 0.0
  %62 = vmatpush.xpose.msra.mxu0 0.0
  %63 = vmatpush.xpose.msra.mxu0 0.0
  %64 = vmatpush.xpose.msra.mxu0 0.0
  %65 = vmatpush.xpose.msra.mxu0 0.0
  %66 = vmatpush.xpose.msra.mxu0 0.0
  %67 = vmatpush.xpose.msra.mxu0 0.0
  %68 = vmatpush.xpose.msra.mxu0 0.0
  %69 = vmatpush.xpose.msra.mxu0 0.0
  %70 = vmatpush.xpose.msra.mxu0 0.0
  %71 = vmatpush.xpose.msra.mxu0 0.0
  %72 = vmatpush.xpose.msra.mxu0 0.0
  %73 = vmatpush.xpose.msra.mxu0 %v56
  %74 = vmatmul.f32.gmra.mxu0 %v53
  %v75 = vpop.f32.mrf.mxu0
  %v76 = vadd.f32 %v49, %v75
  %77 = vdwg.mxu0
  %v78 = vld [vmem:[%s4] sm:$0xff]
  %80 = vset.pattern.permute.xlu0 0
  %81 = vperm.xlu0 %80, %v78
  %v82 = vpop.permute.xlu0 %81
  %v84 = vadd.f32 %v76, %v82
  %v85 = vlaneseq
  %v86 = vshrl.u32 %v85, 7
  %vm87 = vcmp.lt.s32.totalorder %v86, 4
  %v88 = vxor.u32 %v84, 2147483648
  %v89 = vmul.f32 %v88, 1.442695
  %v90 = vpow.pop %v89
  %v91 = vadd.f32 %v90, 1.0
  %v92 = vrcp.pop %v91
  %v93 = vmul.f32 %v91, %v92
  %v94 = vsub.f32 1.0, %v93
  %v95 = vmul.f32 %v92, %v94
  %v96 = vadd.f32 %v92, %v95
  %vm97 = vweird.f32 %v91
  %vm98 = vweird.f32 %v92
  %vm99 = vmor %vm97, %vm98
  %v100 = vsel %vm99, %v92, %v96
  %v101 = vand.u32 2147483647, %v91
  %vm102 = vcmp.eq.f32.partialorder %v101, 8.507059e+37
  %v103 = vand.u32 %v91, 2147483648
  %v104 = vor.u32 1.1754944e-38, %v103
  %v105 = vsel %vm102, %v104, %v100
  %v106 = vmul.f32 1.0, %v105
  %v107 = vsel %vm87, %v84, %v106
  %108 = vst.msk [vmem:[%s5] sm:$0xff] %vm24, %v107
  // Predicated region
  $region22: #{_lr_forward.1} parent=0 // pred_check
    _
  $region23: #{_lr_forward.1} parent=0 // pred_check_branch
    %110 = sbr.rel (0) target = $region25
  $region24: #{_lr_forward.1} parent=0 // pred_region
    _
  $region25: #{_lr_forward.1} parent=0 // pred_fallthru
    _
  // Predicated region
  $region26: #{_lr_forward.1} parent=0 // pred_check
    _
  $region27: #{_lr_forward.1} parent=0 // pred_check_branch
    %112 = sbr.rel (0) target = $region29
  $region28: #{_lr_forward.1} parent=0 // pred_region
    _
  $region29: #{_lr_forward.1} parent=0 // pred_fallthru
    _

</llo_original>
